<compile_context>
chip_gen: v6e
topology: v6e:2x2x1
jax: 0.10.0
libtpu: 0.0.40
codegen_flags: <defaults>
</compile_context>

<pallas_src>
import jax
import jax.numpy as jnp
from jax.experimental import pallas as pl
from jax.experimental.pallas import tpu as pltpu


_MAX_TILE_BYTES = 16 * 1024 * 1024     # cap per (in or out) pipeline buffer
_LANE = 128


def _fbn_kernel(x_ref, ss_ref, o_ref):
    # x_ref : (block_r, hw_block) input tile
    # ss_ref: (block_r, 2); [:, 0] = per-row scale, [:, 1] = per-row shift.
    #         Its dtype sets the compute dtype (f32, or bf16 on v6e/v7x).
    # o_ref : (block_r, hw_block) output tile
    scale = ss_ref[:, 0:1]
    shift = ss_ref[:, 1:2]
    o_ref[...] = (x_ref[...] * scale + shift).astype(o_ref.dtype)


def _vmem_limit_bytes():
    """Scoped-VMEM limit derived from the chip's physical VMEM capacity."""
    try:
        cap = int(pltpu.get_tpu_info().vmem_capacity_bytes)
    except Exception:
        cap = 64 * 1024 * 1024              # conservative fallback (v7x per-TC)
    cap = max(32 * 1024 * 1024, min(cap, 128 * 1024 * 1024))
    # ~3/4 of physical, capped at 96 MiB: 96 MiB on v5e/v6e, 48 MiB on v7x.
    return min(cap * 3 // 4, 96 * 1024 * 1024)


def _native_bf16_math():
    """True on chips with a bf16 VPU (v6e / v7x); v5e and older need f32."""
    try:
        kind = jax.devices()[0].device_kind.lower()
    except Exception:
        return False
    return ("v6" in kind) or ("v7" in kind) or ("7x" in kind)


def _pick_tiles(nc, hw, itemsize, vmem_limit):
    """Byte-budget tile picker respecting (sublane, lane) alignment and the
    true double-buffered pipeline footprint (2x in + 2x out + 2x padded ss)."""
    row_align = max(8, 32 // itemsize)      # 8 rows f32, 16 bf16, 32 int8

    def pad(v, m):
        return -(-v // m) * m

    # VMEM bytes one row of the pipeline costs: in/out tiles are lane-padded
    # to a multiple of 128 and double-buffered; the (block_r, 2) scale/shift
    # block pads 2 -> 128 lanes (counted in f32 to stay conservative).
    def pipe_bytes_per_row(w):
        return 4 * pad(w, _LANE) * itemsize + 2 * _LANE * 4

    budget = vmem_limit - (2 << 20)         # slack for compiler-internal scratch
    tile_cap = min(_MAX_TILE_BYTES, budget // 4)

    # ---- lane (HW) block ----
    if hw <= _LANE:
        hw_block = hw                       # full dim (always legal)
    elif hw % _LANE != 0 and pipe_bytes_per_row(hw) * row_align <= budget:
        # Ragged HW (e.g. 14x14=196): take the full extent -> one contiguous
        # per-row DMA and no ragged edge column of masked partial stores.
        hw_block = hw
    else:
        max_w = max(_LANE, (tile_cap // (row_align * itemsize)) // _LANE * _LANE)
        hw_block = min((hw // _LANE) * _LANE, max_w)

    # ---- row (NC) block ----
    if nc <= row_align:
        block_r = nc                        # full dim (always legal)
    else:
        by_pipe = budget // pipe_bytes_per_row(hw_block)
        by_tile = tile_cap // (pad(hw_block, _LANE) * itemsize)
        max_r = max(row_align, (min(by_pipe, by_tile) // row_align) * row_align)
        block_r = min((nc // row_align) * row_align, max_r)

    return block_r, hw_block


def frozen_batchnorm2d(x, weight, bias, running_mean, running_var, eps=1e-5,
                       *, donate_x=False):
    """FrozenBatchNorm2d forward. x: (N, C, H, W); weight/bias/running_*: (C,)."""
    N, C, H, W = x.shape
    NC, HW = N * C, H * W

    # Fold frozen statistics into per-channel scale/shift in f32 (cheap glue).
    f32 = jnp.float32
    scale = weight.astype(f32) * jax.lax.rsqrt(running_var.astype(f32) + eps)
    shift = bias.astype(f32) - running_mean.astype(f32) * scale

    # Compute dtype: native bf16 where the VPU supports it, else f32.  The ss
    # dtype drives the in-kernel promotion (no full-tile casts on bf16 path).
    if x.dtype == jnp.bfloat16 and _native_bf16_math():
        compute_dtype = jnp.bfloat16
    else:
        compute_dtype = f32

    # One tiny (NC, 2) array; its block index only changes with the row axis,
    # so it stays resident while the kernel sweeps HW.
    ss = jnp.stack([jnp.tile(scale, N), jnp.tile(shift, N)],
                   axis=-1).astype(compute_dtype)

    x2 = x.reshape(NC, HW)
    itemsize = jnp.dtype(x.dtype).itemsize
    vmem_limit = _vmem_limit_bytes()
    block_r, hw_block = _pick_tiles(NC, HW, itemsize, vmem_limit)
    grid = (pl.cdiv(NC, block_r), pl.cdiv(HW, hw_block))

    alias = {0: 0} if donate_x else {}

    out2 = pl.pallas_call(
        _fbn_kernel,
        out_shape=jax.ShapeDtypeStruct((NC, HW), x.dtype),
        grid=grid,
        in_specs=[
            pl.BlockSpec((block_r, hw_block), lambda i, j: (i, j)),
            pl.BlockSpec((block_r, 2), lambda i, j: (i, 0)),
        ],
        out_specs=pl.BlockSpec((block_r, hw_block), lambda i, j: (i, j)),
        input_output_aliases=alias,
        compiler_params=pltpu.CompilerParams(
            dimension_semantics=("parallel", "parallel"),
            vmem_limit_bytes=vmem_limit,
        ),
    )(x2, ss)

    return out2.reshape(N, C, H, W)


def _reference(x, weight, bias, running_mean, running_var, eps=1e-5):
    w = weight.reshape(1, -1, 1, 1)
    b = bias.reshape(1, -1, 1, 1)
    rv = running_var.reshape(1, -1, 1, 1)
    rm = running_mean.reshape(1, -1, 1, 1)
    s = w * jax.lax.rsqrt(rv + eps)
    return x * s + (b - rm * s)


if __name__ == "__main__":
    key = jax.random.PRNGKey(0)
    fbn = jax.jit(frozen_batchnorm2d)

    # Primary small shape (per module spec), a ragged shape (NC % 8 != 0 and
    # HW % 128 != 0 -> full-HW lane blocks), a tiny-HW shape, and a bf16 shape
    # exercising the native-bf16 path on v6e/v7x (f32 path on v5e).
    cases = [
        ((2, 4, 16, 16), jnp.float32, 1e-5),
        ((1, 3, 14, 14), jnp.float32, 1e-5),
        ((2, 8, 7, 7), jnp.float32, 1e-5),
        ((2, 4, 16, 16), jnp.bfloat16, 5e-2),
    ]

    for (N, C, H, W), dtype, tol in cases:
        kx, kw, kb, km, kv, key = jax.random.split(key, 6)
        x = jax.random.normal(kx, (N, C, H, W), dtype=jnp.float32).astype(dtype)

        # Deterministic "frozen" buffers (init w=1, b=0, rm=0, rv=1; perturbed
        # so the kernel does something non-trivial).
        weight = jnp.ones((C,), jnp.float32) + 0.1 * jax.random.normal(kw, (C,))
        bias = 0.1 * jax.random.normal(kb, (C,))
        running_mean = 0.1 * jax.random.normal(km, (C,))
        running_var = jnp.ones((C,), jnp.float32) + 0.05 * jnp.abs(
            jax.random.normal(kv, (C,)))

        out = fbn(x, weight, bias, running_mean, running_var)
        out = jax.block_until_ready(out)

        ref = _reference(x.astype(jnp.float32), weight, bias,
                         running_mean, running_var)
        assert jnp.allclose(out.astype(jnp.float32), ref, atol=tol, rtol=tol), (
            f"mismatch vs reference for shape {(N, C, H, W)} dtype {dtype}")

    print("KERNEL_OK")
</pallas_src>

<mosaic_0001>
module attributes {stable_mosaic.version = 11 : i64} {
  func.func @_fbn_kernel(%arg0: i32, %arg1: i32, %arg2: memref<8x256xf32, #tpu.memory_space<vmem>>, %arg3: memref<8x2xf32, #tpu.memory_space<vmem>>, %arg4: memref<8x256xf32, #tpu.memory_space<vmem>>) attributes {dimension_semantics = [#tpu.dimension_semantics<parallel>, #tpu.dimension_semantics<parallel>], iteration_bounds = array<i64: 1, 1>, scalar_prefetch = 0 : i64, scratch_operands = 0 : i64, tpu.core_type = #tpu.core_type<tc>, window_params = [{transform_indices = @transform_0, window_bounds = array<i64: 8, 256>}, {transform_indices = @transform_1, window_bounds = array<i64: 8, 2>}, {transform_indices = @transform_2, window_bounds = array<i64: 8, 256>}]} {
    %c0 = arith.constant 0 : index
    %c0_0 = arith.constant 0 : index
    %0 = vector.load %arg3[%c0, %c0_0] : memref<8x2xf32, #tpu.memory_space<vmem>>, vector<8x1xf32>
    %c0_1 = arith.constant 0 : index
    %c1 = arith.constant 1 : index
    %1 = vector.load %arg3[%c0_1, %c1] : memref<8x2xf32, #tpu.memory_space<vmem>>, vector<8x1xf32>
    %c0_2 = arith.constant 0 : index
    %c0_3 = arith.constant 0 : index
    %2 = vector.load %arg2[%c0_2, %c0_3] : memref<8x256xf32, #tpu.memory_space<vmem>>, vector<8x256xf32>
    %3 = vector.broadcast %0 : vector<8x1xf32> to vector<8x256xf32>
    %4 = arith.mulf %2, %3 : vector<8x256xf32>
    %5 = vector.broadcast %1 : vector<8x1xf32> to vector<8x256xf32>
    %6 = arith.addf %4, %5 : vector<8x256xf32>
    %c0_4 = arith.constant 0 : index
    %c0_5 = arith.constant 0 : index
    %7 = vector.load %arg4[%c0_4, %c0_5] : memref<8x256xf32, #tpu.memory_space<vmem>>, vector<8x256xf32>
    tpu.vector_store %arg4[%c0_4, %c0_5], %6 {strides = array<i32>} : memref<8x256xf32, #tpu.memory_space<vmem>>, vector<8x256xf32>,
    return
  }
  func.func @transform_0(%arg0: i32, %arg1: i32) -> (i32, i32) {
    %c0_i32 = arith.constant 0 : i32
    return %arg0, %arg1 : i32, i32
  }
  func.func @transform_1(%arg0: i32, %arg1: i32) -> (i32, i32) {
    %c0_i32 = arith.constant 0 : i32
    %c0_i32_0 = arith.constant 0 : i32
    return %arg0, %c0_i32 : i32, i32
  }
  func.func @transform_2(%arg0: i32, %arg1: i32) -> (i32, i32) {
    %c0_i32 = arith.constant 0 : i32
    return %arg0, %arg1 : i32, i32
  }
}

</mosaic_0001>

<llo_original>
// kernel: tile.17
$region0: #{tile.17}
  #allocation0 [shape = 's32[1]{0}', space=sflag, size = 0x4, scoped, tag = 'scoped memory for tile.17']
  %s0 = inlined_call_operand.vmem [shape: f32[4], index: 0, kind: input, shape index: {}]
  %s1 = inlined_call_operand.vmem [shape: f32[2,4], index: 1, kind: output, shape index: {}]
  // Predicated region
  $region2: #{tile.17} parent=0 // pred_check
    _
  $region3: #{tile.17} parent=0 // pred_check_branch
    %3 = sbr.rel (0) target = $region5
  $region4: #{tile.17} parent=0 // pred_region
    _
  $region5: #{tile.17} parent=0 // pred_fallthru
    _
  %v4 = vld [vmem:[%s0] ss:$0 sm:$0xff]
  %5 = vst [vmem:[%s1] sm:$0x3] %v4

// kernel: tile.19
$region0: #{tile.19}
  %s0 = inlined_call_operand.vmem [shape: f32[2,4], index: 0, kind: input, shape index: {}]
  %s1 = inlined_call_operand.vmem [shape: f32[8,1], index: 1, kind: output, shape index: {}]
  $region1: #{tile.19} parent=0
    #allocation0 [shape = 'u8[4096]{0}', space=vmem, size = 0x1000, scoped, tag = 'scoped mem for output reshape']
    #allocation1 [shape = 'u8[4096]{0}', space=vmem, size = 0x1000, scoped, tag = 'scoped mem for input reshape']
    %s3 = sshll.u32 1, 2
    %s4 = ssub.s32 %s3, 1
    %v5 = vld [vmem:[%s0] sm:%s4]
    %6 = vst [vmem:[#allocation1] sm:%s4] %v5
    %v7 = vld [vmem:[#allocation1] sm:$0x1]
    %vm8 = vcmask 31744
    %9 = vst.msk [vmem:[#allocation0] sm:$0x1] %vm8, %v7
    %s10 = scalar_lea.vmem [#allocation1], 1
    %v11 = vld [vmem:[%s10] sm:$0x1]
    %12 = vrot.lane.b32.xlu0 %v11, 4
    %v13 = vpop.permute.xlu0 %12
    %vm14 = vcmask 64544
    %15 = vst.msk [vmem:[#allocation0] sm:$0x1] %vm14, %v13
    %s17 = sshll.u32 1, 1
    %s18 = ssub.s32 %s17, 1
    %v20 = vld [vmem:[#allocation0] sm:%s18]
    %s21 = sshll.u32 1, 1
    %s22 = ssub.s32 %s21, 1
    %23 = vst [vmem:[%s1] sm:%s22] %v20

// kernel: frozen_batchnorm2d.1
$region0: #{frozen_batchnorm2d.1}
  #allocation0 [shape = 'u32[]', space=smem, size = 0x4, offset = 0x4, fixed_abs, tag = 'smem constant byte address 0x4 - core index']
  #allocation1 [shape = 'u32[144,128]{1,0:T(1,128)}', space=vmem, size = 0x12000, scoped, tag = 'internal scratch']
  %s0 = inlined_call_operand.vmem [shape: f32[8,256], index: 0, kind: input, shape index: {}]
  %s1 = inlined_call_operand.vmem [shape: f32[8,2], index: 1, kind: input, shape index: {}]
  %s2 = inlined_call_operand.vmem [shape: f32[8,256], index: 2, kind: output, shape index: {}]
  %s3 = sld [smem:[#allocation0]]
  $region18: #{frozen_batchnorm2d.1} parent=0
    _
  %s5 = ssub.s32 1, %s3
  %s6 = scalar_select 0, %s5, %s3
  // Predicated region
  $region2: #{frozen_batchnorm2d.1} parent=0 // pred_check
    _
  $region3: #{frozen_batchnorm2d.1} parent=0 // pred_check_branch
    %8 = sbr.rel (0) target = $region5
  $region4: #{frozen_batchnorm2d.1} parent=0 // pred_region
    _
  $region5: #{frozen_batchnorm2d.1} parent=0 // pred_fallthru
    _
  // Predicated region
  $region6: #{frozen_batchnorm2d.1} parent=0 // pred_check
    _
  $region7: #{frozen_batchnorm2d.1} parent=0 // pred_check_branch
    %10 = sbr.rel (0) target = $region9
  $region8: #{frozen_batchnorm2d.1} parent=0 // pred_region
    _
  $region9: #{frozen_batchnorm2d.1} parent=0 // pred_fallthru
    _
  %v11 = vld [vmem:[%s1] sm:$0xff]
  %v12 = vld [vmem:[%s0] sm:$0xff]
  %v13 = vld [vmem:[%s0 + $0x8] sm:$0xff]
  %15 = vset.pattern.permute.xlu0 0
  %16 = vperm.xlu0 %15, %v11
  %v17 = vpop.permute.xlu0 %16
  %v19 = vmul.f32 %v12, %v17
  %v20 = vmul.f32 %v13, %v17
  %21 = vset.pattern.permute.xlu0 1
  %22 = vperm.xlu0 %21, %v11
  %v23 = vpop.permute.xlu0 %22
  %v25 = vadd.f32 %v19, %v23
  %v26 = vadd.f32 %v20, %v23
  %27 = vst [vmem:[%s2] sm:$0xff] %v25
  %28 = vst [vmem:[%s2 + $0x8] sm:$0xff] %v26
  // Predicated region
  $region10: #{frozen_batchnorm2d.1} parent=0 // pred_check
    _
  $region11: #{frozen_batchnorm2d.1} parent=0 // pred_check_branch
    %30 = sbr.rel (0) target = $region13
  $region12: #{frozen_batchnorm2d.1} parent=0 // pred_region
    _
  $region13: #{frozen_batchnorm2d.1} parent=0 // pred_fallthru
    _
  // Predicated region
  $region14: #{frozen_batchnorm2d.1} parent=0 // pred_check
    _
  $region15: #{frozen_batchnorm2d.1} parent=0 // pred_check_branch
    %32 = sbr.rel (0) target = $region17
  $region16: #{frozen_batchnorm2d.1} parent=0 // pred_region
    _
  $region17: #{frozen_batchnorm2d.1} parent=0 // pred_fallthru
    _

</llo_original>
